<compile_context>
chip_gen: v5e
topology: v5e:2x2
jax: 0.10.0
libtpu: 0.0.40
codegen_flags: <defaults>
</compile_context>

<pallas_src>
import functools

import numpy as np
import jax
import jax.numpy as jnp
from jax.experimental import pallas as pl
from jax.experimental.pallas import tpu as pltpu


# ---------------------------------------------------------------------------
# DCT matrices (scipy.fftpack semantics, norm=None)
# ---------------------------------------------------------------------------
@functools.lru_cache(maxsize=None)
def dct2_matrix(n: int) -> np.ndarray:
    """Matrix D such that (x @ D)[k] == scipy.fftpack.dct(x, type=2, norm=None)[k]."""
    i = np.arange(n)[:, None]   # spatial index
    k = np.arange(n)[None, :]   # frequency index
    return (2.0 * np.cos(np.pi * k * (2 * i + 1) / (2.0 * n))).astype(np.float32)


@functools.lru_cache(maxsize=None)
def idct2_matrix(n: int) -> np.ndarray:
    """Matrix Di such that (x @ Di)[m] == scipy.fftpack.idct(x, type=2, norm=None)[m]."""
    k = np.arange(n)[:, None]   # frequency index
    m = np.arange(n)[None, :]   # spatial index
    D = 2.0 * np.cos(np.pi * k * (2 * m + 1) / (2.0 * n))
    D[0, :] = 1.0               # DC row of the un-normalized DCT-III
    return D.astype(np.float32)


def _block_diag(mat: np.ndarray, p: int) -> np.ndarray:
    """p copies of `mat` along the diagonal -> (p*n, p*n)."""
    n = mat.shape[0]
    out = np.zeros((p * n, p * n), dtype=np.float32)
    for j in range(p):
        out[j * n:(j + 1) * n, j * n:(j + 1) * n] = mat
    return out


def _round_up(x: int, m: int) -> int:
    return -(-x // m) * m


def _pick_tile(num_rows: int, lane_width: int, bytes_per_el: int = 4) -> int:
    """Row-tile size: ~2 MiB per x tile, multiple of 8, >=2 grid steps when possible."""
    target_bytes = 2 * 1024 * 1024
    tm = max(8, (target_bytes // (lane_width * bytes_per_el)) // 8 * 8)
    if num_rows > 8:
        # Ensure at least 2 grid steps so the grid can shard across v7x's 2 TensorCores.
        half = _round_up(_round_up(num_rows, 2) // 2, 8)
        tm = min(tm, half)
    tm = min(tm, _round_up(num_rows, 8))
    return tm


# ---------------------------------------------------------------------------
# Kernel
# ---------------------------------------------------------------------------
def _dct1d_kernel(x_ref, dv_ref, di_ref, t_ref, o_ref, *, residual: bool):
    x = x_ref[...]                                                  # (tm, L) f32
    # Forward DCT-II with v already folded into the matrix (MXU).
    f2 = jnp.dot(x, dv_ref[...], preferred_element_type=jnp.float32)
    # Soft thresholding: sign(z)*relu(|z|-t) == z - clip(z, -t, t) for t >= 0.
    t = t_ref[...]                                                  # (1, L)
    f3 = f2 - jnp.clip(f2, -t, t)
    # Inverse DCT (un-normalized DCT-III), again an MXU matmul.
    f4 = jnp.dot(f3, di_ref[...], preferred_element_type=jnp.float32)
    o_ref[...] = f4 + x if residual else f4


# ---------------------------------------------------------------------------
# Wrapper
# ---------------------------------------------------------------------------
def dct1d(x, v, t, *, residual=True, retain_DC=False):
    """Pallas DCT1D forward. x: [..., N] float32. v, t: per-frequency params.

    If retain_DC=True, `v` and `t` have length N-1 (applied to frequencies 1..N-1);
    the DC channel passes through untouched (v=1, t=0 padding is an exact identity
    under the soft threshold).
    """
    orig_shape = x.shape
    n = orig_shape[-1]
    x2 = x.reshape(-1, n).astype(jnp.float32)
    m = x2.shape[0]

    if retain_DC:
        assert v.shape == (n - 1,) and t.shape == (n - 1,)
        v_full = jnp.concatenate([jnp.ones((1,), jnp.float32), v.astype(jnp.float32)])
        t_full = jnp.concatenate([jnp.zeros((1,), jnp.float32), t.astype(jnp.float32)])
    else:
        assert v.shape == (n,) and t.shape == (n,)
        v_full = v.astype(jnp.float32)
        t_full = t.astype(jnp.float32)

    # Lane-dense packing: P rows of length n become one row of length L = P*n
    # (contiguous reshape); the transforms become block-diagonal so each packed
    # sub-block is processed independently.
    p = 128 // n if (n < 128 and 128 % n == 0) else 1
    L = p * n

    D_np = dct2_matrix(n)
    Di_np = idct2_matrix(n)
    if p > 1:
        D_bd = jnp.asarray(_block_diag(D_np, p))
        Di_bd = jnp.asarray(_block_diag(Di_np, p))
        v_lane = jnp.tile(v_full, (p,))
        t_lane = jnp.tile(t_full, (p,)).reshape(1, L)
    else:
        D_bd = jnp.asarray(D_np)
        Di_bd = jnp.asarray(Di_np)
        v_lane = v_full
        t_lane = t_full.reshape(1, L)

    # Fold the per-frequency scale into the forward DCT matrix: x @ (D diag(v)).
    Dv = D_bd * v_lane[None, :]

    # Row tiling over the packed layout (ceil-div grid; ragged rows zero-padded,
    # which is exact: DCT/threshold/IDCT of zeros is zeros, then sliced away).
    mp = -(-m // p)                     # packed row count
    tm = _pick_tile(mp, L)
    mp_pad = _round_up(mp, tm)
    m_pad = mp_pad * p
    if m_pad != m:
        x2 = jnp.pad(x2, ((0, m_pad - m), (0, 0)))
    xp = x2.reshape(mp_pad, L)

    grid = (mp_pad // tm,)
    kernel = functools.partial(_dct1d_kernel, residual=residual)

    cost = pl.CostEstimate(
        flops=2 * 2 * mp_pad * L * L,                        # two matmuls
        transcendentals=0,
        bytes_accessed=2 * mp_pad * L * 4 + 2 * L * L * 4 + L * 4,
    )

    out = pl.pallas_call(
        kernel,
        out_shape=jax.ShapeDtypeStruct((mp_pad, L), jnp.float32),
        grid_spec=pltpu.PrefetchScalarGridSpec(
            num_scalar_prefetch=0,
            grid=grid,
            in_specs=[
                pl.BlockSpec((tm, L), lambda i: (i, 0)),     # packed x rows
                pl.BlockSpec((L, L), lambda i: (0, 0)),      # block-diag D * diag(v)
                pl.BlockSpec((L, L), lambda i: (0, 0)),      # block-diag IDCT matrix
                pl.BlockSpec((1, L), lambda i: (0, 0)),      # thresholds (lane-tiled)
            ],
            out_specs=pl.BlockSpec((tm, L), lambda i: (i, 0)),
        ),
        compiler_params=pltpu.CompilerParams(
            dimension_semantics=("parallel",),
            vmem_limit_bytes=64 * 1024 * 1024,
        ),
        cost_estimate=cost,
    )(xp, Dv, Di_bd, t_lane)

    out = out.reshape(m_pad, n)[:m]
    return out.reshape(orig_shape)


# ---------------------------------------------------------------------------
# Pure-JAX reference mirroring the PyTorch forward
# ---------------------------------------------------------------------------
def dct1d_reference(x, v, t, *, residual=True, retain_DC=False):
    n = x.shape[-1]
    D = jnp.asarray(dct2_matrix(n))
    Di = jnp.asarray(idct2_matrix(n))
    f1 = x @ D
    if retain_DC:
        f2 = v * f1[..., 1:]
        f3 = jnp.sign(f2) * jnp.maximum(jnp.abs(f2) - t, 0.0)
        f4 = jnp.concatenate([f1[..., 0:1], f3], axis=-1) @ Di
    else:
        f2 = v * f1
        f3 = jnp.sign(f2) * jnp.maximum(jnp.abs(f2) - t, 0.0)
        f4 = f3 @ Di
    return f4 + x if residual else f4


if __name__ == "__main__":
    key = jax.random.PRNGKey(0)
    kx, kv, kt = jax.random.split(key, 3)

    num_features = 16

    # Main case: retain_DC=False, residual=True (lane-dense packing, 2 grid steps).
    x = jax.random.normal(kx, (2, 4, 16, num_features), dtype=jnp.float32)
    v = jax.random.uniform(kv, (num_features,), dtype=jnp.float32)   # torch.rand -> U[0,1)
    t = jax.random.uniform(kt, (num_features,), dtype=jnp.float32)

    y = jax.block_until_ready(dct1d(x, v, t, residual=True, retain_DC=False))
    y_ref = dct1d_reference(x, v, t, residual=True, retain_DC=False)
    np.testing.assert_allclose(np.asarray(y), np.asarray(y_ref), rtol=1e-4, atol=1e-3)

    # Secondary case: retain_DC=True (DC pass-through) with a row count that needs
    # padding for the packed layout (3*7 = 21 rows).
    x_odd = jax.random.normal(kx, (3, 7, num_features), dtype=jnp.float32)
    v_dc = jax.random.uniform(kv, (num_features - 1,), dtype=jnp.float32)
    t_dc = jax.random.uniform(kt, (num_features - 1,), dtype=jnp.float32)

    y2 = jax.block_until_ready(dct1d(x_odd, v_dc, t_dc, residual=True, retain_DC=True))
    y2_ref = dct1d_reference(x_odd, v_dc, t_dc, residual=True, retain_DC=True)
    np.testing.assert_allclose(np.asarray(y2), np.asarray(y2_ref), rtol=1e-4, atol=1e-3)

    print("KERNEL_OK")
</pallas_src>

<mosaic_0001>
module attributes {stable_mosaic.version = 11 : i64} {
  func.func @_dct1d_kernel(%arg0: i32, %arg1: memref<8x128xf32, #tpu.memory_space<vmem>>, %arg2: memref<128x128xf32, #tpu.memory_space<vmem>>, %arg3: memref<128x128xf32, #tpu.memory_space<vmem>>, %arg4: memref<1x128xf32, #tpu.memory_space<vmem>>, %arg5: memref<8x128xf32, #tpu.memory_space<vmem>>) attributes {dimension_semantics = [#tpu.dimension_semantics<parallel>], iteration_bounds = array<i64: 2>, scalar_prefetch = 0 : i64, scratch_operands = 0 : i64, tpu.core_type = #tpu.core_type<tc>, window_params = [{transform_indices = @transform_0, window_bounds = array<i64: 8, 128>}, {pipeline_mode = #tpu.pipeline_mode<synchronous>, transform_indices = @transform_1, window_bounds = array<i64: 128, 128>}, {pipeline_mode = #tpu.pipeline_mode<synchronous>, transform_indices = @transform_2, window_bounds = array<i64: 128, 128>}, {pipeline_mode = #tpu.pipeline_mode<synchronous>, transform_indices = @transform_3, window_bounds = array<i64: 1, 128>}, {transform_indices = @transform_4, window_bounds = array<i64: 8, 128>}]} {
    %c0 = arith.constant 0 : index
    %c0_0 = arith.constant 0 : index
    %0 = vector.load %arg1[%c0, %c0_0] : memref<8x128xf32, #tpu.memory_space<vmem>>, vector<8x128xf32>
    %c0_1 = arith.constant 0 : index
    %c0_2 = arith.constant 0 : index
    %1 = vector.load %arg2[%c0_1, %c0_2] : memref<128x128xf32, #tpu.memory_space<vmem>>, vector<128x128xf32>
    %cst = arith.constant dense<0.000000e+00> : vector<8x128xf32>
    %2 = tpu.matmul %0, %1, %cst {dimension_numbers = #tpu.dot_dimension_numbers<[1], [0], [0], [1], [0, 0, 1, 1], [], []>} : vector<8x128xf32>, vector<128x128xf32>, vector<8x128xf32> -> vector<8x128xf32>
    %c0_3 = arith.constant 0 : index
    %c0_4 = arith.constant 0 : index
    %3 = vector.load %arg4[%c0_3, %c0_4] : memref<1x128xf32, #tpu.memory_space<vmem>>, vector<1x128xf32>
    %cst_5 = arith.constant 0.000000e+00 : f32
    %4 = vector.broadcast %cst_5 : f32 to vector<1x128xf32>
    %5 = arith.subf %4, %3 : vector<1x128xf32>
    %6 = vector.broadcast %5 : vector<1x128xf32> to vector<8x128xf32>
    %7 = arith.maximumf %6, %2 : vector<8x128xf32>
    %8 = vector.broadcast %3 : vector<1x128xf32> to vector<8x128xf32>
    %9 = arith.minimumf %8, %7 : vector<8x128xf32>
    %10 = arith.subf %2, %9 : vector<8x128xf32>
    %c0_6 = arith.constant 0 : index
    %c0_7 = arith.constant 0 : index
    %11 = vector.load %arg3[%c0_6, %c0_7] : memref<128x128xf32, #tpu.memory_space<vmem>>, vector<128x128xf32>
    %cst_8 = arith.constant dense<0.000000e+00> : vector<8x128xf32>
    %12 = tpu.matmul %10, %11, %cst_8 {dimension_numbers = #tpu.dot_dimension_numbers<[1], [0], [0], [1], [0, 0, 1, 1], [], []>} : vector<8x128xf32>, vector<128x128xf32>, vector<8x128xf32> -> vector<8x128xf32>
    %13 = arith.addf %12, %0 : vector<8x128xf32>
    %c0_9 = arith.constant 0 : index
    %c0_10 = arith.constant 0 : index
    %14 = vector.load %arg5[%c0_9, %c0_10] : memref<8x128xf32, #tpu.memory_space<vmem>>, vector<8x128xf32>
    tpu.vector_store %arg5[%c0_9, %c0_10], %13 {strides = array<i32>} : memref<8x128xf32, #tpu.memory_space<vmem>>, vector<8x128xf32>,
    return
  }
  func.func @transform_0(%arg0: i32) -> (i32, i32) {
    %c0_i32 = arith.constant 0 : i32
    %c0_i32_0 = arith.constant 0 : i32
    return %arg0, %c0_i32 : i32, i32
  }
  func.func @transform_1(%arg0: i32) -> (i32, i32) {
    %c0_i32 = arith.constant 0 : i32
    %c0_i32_0 = arith.constant 0 : i32
    %c0_i32_1 = arith.constant 0 : i32
    return %c0_i32, %c0_i32_0 : i32, i32
  }
  func.func @transform_2(%arg0: i32) -> (i32, i32) {
    %c0_i32 = arith.constant 0 : i32
    %c0_i32_0 = arith.constant 0 : i32
    %c0_i32_1 = arith.constant 0 : i32
    return %c0_i32, %c0_i32_0 : i32, i32
  }
  func.func @transform_3(%arg0: i32) -> (i32, i32) {
    %c0_i32 = arith.constant 0 : i32
    %c0_i32_0 = arith.constant 0 : i32
    %c0_i32_1 = arith.constant 0 : i32
    return %c0_i32, %c0_i32_0 : i32, i32
  }
  func.func @transform_4(%arg0: i32) -> (i32, i32) {
    %c0_i32 = arith.constant 0 : i32
    %c0_i32_0 = arith.constant 0 : i32
    return %arg0, %c0_i32 : i32, i32
  }
}

</mosaic_0001>

<llo_original>
// kernel: tpu_custom_call.1
$region0: #{tpu_custom_call.1}
  #allocation0 [shape = 'u32[]', space=smem, size = 0x4, offset = 0x4, fixed_abs, tag = 'smem constant byte address 0x4 - core index']
  #allocation1 [shape = 'u32[72,128]{1,0:T(1,128)}', space=vmem, size = 0x9000, scoped, tag = 'internal scratch']
  %s0 = inlined_call_operand.hbm [shape: f32[16,128], index: 0, kind: input, shape index: {}]
  %s1 = inlined_call_operand.hbm [shape: f32[128,128], index: 1, kind: input, shape index: {}]
  %s2 = inlined_call_operand.hbm [shape: f32[128,128], index: 2, kind: input, shape index: {}]
  %s3 = inlined_call_operand.vmem [shape: f32[1,128], index: 3, kind: input, shape index: {}]
  %s4 = inlined_call_operand.hbm [shape: f32[16,128], index: 4, kind: output, shape index: {}]
  %s5 = sld [smem:[#allocation0]]
  $region61: #{tpu_custom_call.1} parent=0
    _
  %s7 = ssub.s32 1, %s5
  %s8 = scalar_select 0, %s7, %s5
  $region1: #{tpu_custom_call.1} parent=0
    #allocation2 [shape = 'u8[8192]{0}', space=vmem, size = 0x2000, scoped, tag = 'input window, operand 0']
    #allocation3 [shape = 's32[2]{0}', space=sflag, size = 0x8, scoped, tag = 'scoped memory for tpu_custom_call.1']
    #allocation4 [shape = 's32[2]{0}', space=sflag, size = 0x8, scoped, tag = 'scoped memory for tpu_custom_call.1']
    #allocation5 [shape = 'u8[65536]{0}', space=vmem, size = 0x10000, scoped, tag = 'input window, operand 1, single buffered']
    #allocation6 [shape = 's32[1]{0}', space=sflag, size = 0x4, scoped, tag = 'scoped memory for tpu_custom_call.1']
    #allocation7 [shape = 'u8[65536]{0}', space=vmem, size = 0x10000, scoped, tag = 'input window, operand 2, single buffered']
    #allocation8 [shape = 'u8[8192]{0}', space=vmem, size = 0x2000, scoped, tag = 'output window, operand 0']
    %9 = vsyncpa [#allocation3], 0
    %s10 = scalar_lea.sflag [#allocation3], 1
    %11 = vsyncpa %s10, 0
    %12 = vsyncpa [#allocation6], 0
    %13 = vsyncpa [#allocation4], 0
    %s14 = scalar_lea.sflag [#allocation4], 1
    %15 = vsyncpa %s14, 0
    loop: start=0, step=1, limit=4
    $region2: #{tpu_custom_call.1} parent=1 // loop_pre_header
      _
    $region3: #{tpu_custom_call.1} parent=1 // loop_header
      %s17 = sphi 0, %s21
      %p18 = scmp.ge.s32.totalorder %s17, 4
      %s27 = sphi 0, %s29
      %s30 = sphi 0, %s27
      %s31 = sphi 0, %s30
      %s47 = sphi 0, %s31
      %s51 = sphi 0, %s51
      %s53 = sphi 0, %s51
      %s54 = sphi 0, %s53
      %s68 = sphi 0, %s54
      %s72 = sphi 0, %s72
      %s74 = sphi 0, %s72
      %s75 = sphi 0, %s74
      %s89 = sphi 0, %s75
      %s93 = sphi 0, %s93
      %s95 = sphi 0, %s93
      %s96 = sphi 0, %s95
      %s110 = sphi 0, %s96
      %s116 = sphi 0, %s118
      %s119 = sphi 0, %s116
      %s120 = sphi 0, %s119
      %s136 = sphi 0, %s120
    $region4: #{tpu_custom_call.1} parent=1 // loop_header_branch
      %20 = sbr.rel (%p18) target = $region8
    $region5: #{tpu_custom_call.1} parent=1 // loop_body
      %s22 = ssub.s32 %s17, 1
      %s23 = ssub.s32 %s17, 2
      %s24 = sadd.s32 %s17, 1
      %s25 = ssub.s32 %s17, %s24
      %p26 = scmp.eq.s32.totalorder %s25, 0
      %s28 = sadd.s32 %s27, 1
      %s29 = scalar_select %p26, %s27, %s28
      %p32 = pneg %p26
      %p33 = scmp.eq.s32.totalorder %s17, 1
      %p34 = por %p32, %p33
      %p35 = scmp.ne.s32.totalorder %s27, %s30
      %p36 = scmp.eq.s32.totalorder %s17, 0
      %p37 = por %p35, %p36
      %p38 = scmp.ne.s32.totalorder %s27, %s30
      %p39 = scmp.eq.s32.totalorder %s22, 1
      %p40 = por %p38, %p39
      %p41 = scmp.ne.s32.totalorder %s30, %s31
      %p42 = scmp.eq.s32.totalorder %s22, 0
      %p43 = por %p41, %p42
      %p44 = scmp.ne.s32.totalorder %s30, %s31
      %p45 = scmp.eq.s32.totalorder %s23, 1
      %p46 = por %p44, %p45
      %p48 = scmp.ne.s32.totalorder %s31, %s47
      %p49 = scmp.eq.s32.totalorder %s23, 0
      %p50 = por %p48, %p49
      %s52 = sadd.s32 %s51, 1
      %p55 = scmp.eq.s32.totalorder %s17, 1
      %p56 = scmp.ne.s32.totalorder %s51, %s53
      %p57 = scmp.eq.s32.totalorder %s17, 0
      %p58 = por %p56, %p57
      %p59 = scmp.ne.s32.totalorder %s51, %s53
      %p60 = scmp.eq.s32.totalorder %s22, 1
      %p61 = por %p59, %p60
      %p62 = scmp.ne.s32.totalorder %s53, %s54
      %p63 = scmp.eq.s32.totalorder %s22, 0
      %p64 = por %p62, %p63
      %p65 = scmp.ne.s32.totalorder %s53, %s54
      %p66 = scmp.eq.s32.totalorder %s23, 1
      %p67 = por %p65, %p66
      %p69 = scmp.ne.s32.totalorder %s54, %s68
      %p70 = scmp.eq.s32.totalorder %s23, 0
      %p71 = por %p69, %p70
      %s73 = sadd.s32 %s72, 1
      %p76 = scmp.eq.s32.totalorder %s17, 1
      %p77 = scmp.ne.s32.totalorder %s72, %s74
      %p78 = scmp.eq.s32.totalorder %s17, 0
      %p79 = por %p77, %p78
      %p80 = scmp.ne.s32.totalorder %s72, %s74
      %p81 = scmp.eq.s32.totalorder %s22, 1
      %p82 = por %p80, %p81
      %p83 = scmp.ne.s32.totalorder %s74, %s75
      %p84 = scmp.eq.s32.totalorder %s22, 0
      %p85 = por %p83, %p84
      %p86 = scmp.ne.s32.totalorder %s74, %s75
      %p87 = scmp.eq.s32.totalorder %s23, 1
      %p88 = por %p86, %p87
      %p90 = scmp.ne.s32.totalorder %s75, %s89
      %p91 = scmp.eq.s32.totalorder %s23, 0
      %p92 = por %p90, %p91
      %s94 = sadd.s32 %s93, 1
      %p97 = scmp.eq.s32.totalorder %s17, 1
      %p98 = scmp.ne.s32.totalorder %s93, %s95
      %p99 = scmp.eq.s32.totalorder %s17, 0
      %p100 = por %p98, %p99
      %p101 = scmp.ne.s32.totalorder %s93, %s95
      %p102 = scmp.eq.s32.totalorder %s22, 1
      %p103 = por %p101, %p102
      %p104 = scmp.ne.s32.totalorder %s95, %s96
      %p105 = scmp.eq.s32.totalorder %s22, 0
      %p106 = por %p104, %p105
      %p107 = scmp.ne.s32.totalorder %s95, %s96
      %p108 = scmp.eq.s32.totalorder %s23, 1
      %p109 = por %p107, %p108
      %p111 = scmp.ne.s32.totalorder %s96, %s110
      %p112 = scmp.eq.s32.totalorder %s23, 0
      %p113 = por %p111, %p112
      %s114 = ssub.s32 %s17, %s24
      %p115 = scmp.eq.s32.totalorder %s114, 0
      %s117 = sadd.s32 %s116, 1
      %s118 = scalar_select %p115, %s116, %s117
      %p121 = pneg %p115
      %p122 = scmp.eq.s32.totalorder %s17, 1
      %p123 = por %p121, %p122
      %p124 = scmp.ne.s32.totalorder %s116, %s119
      %p125 = scmp.eq.s32.totalorder %s17, 0
      %p126 = por %p124, %p125
      %p127 = scmp.ne.s32.totalorder %s116, %s119
      %p128 = scmp.eq.s32.totalorder %s22, 1
      %p129 = por %p127, %p128
      %p130 = scmp.ne.s32.totalorder %s119, %s120
      %p131 = scmp.eq.s32.totalorder %s22, 0
      %p132 = por %p130, %p131
      %p133 = scmp.ne.s32.totalorder %s119, %s120
      %p134 = scmp.eq.s32.totalorder %s23, 1
      %p135 = por %p133, %p134
      %p137 = scmp.ne.s32.totalorder %s120, %s136
      %p138 = scmp.eq.s32.totalorder %s23, 0
      %p139 = por %p137, %p138
      %p140 = scmp.le.s32.totalorder 1, %s17
      %p141 = scmp.lt.s32.totalorder %s17, 3
      %p142 = pnand %p140, %p141
      %p143 = pneg %p142
      // Predicated region
      $region9: #{tpu_custom_call.1} parent=5 // pred_check
        _
      $region10: #{tpu_custom_call.1} parent=5 // pred_check_branch
        %145 = sbr.rel (%p142) target = $region12
      $region11: #{tpu_custom_call.1} parent=5 // pred_region
        %s146 = ssub.s32 %s17, 1
        // Predicated region
        $region13: #{tpu_custom_call.1} parent=11 // pred_check
          %p147 = pneg %p64
        $region14: #{tpu_custom_call.1} parent=11 // pred_check_branch
          %149 = sbr.rel (%p147) target = $region16
        $region15: #{tpu_custom_call.1} parent=11 // pred_region
          %151 = vsyncadd [#allocation6], 0
          %s152 = sshll.u32 %s1, 4
          %s153 = int_to_ptr.hbm [resolvable:$true] %s152
          %s154 = sshll.u32 [#allocation5], 4
          %s155 = int_to_ptr.vmem [resolvable:$true] %s154
          %160 = dma.hbm_to_vmem [thread:$0]  %s153, 2048, %s155, [#allocation6], 128, 128, 8
        $region16: #{tpu_custom_call.1} parent=11 // pred_fallthru
          _
        // Predicated region
        $region17: #{tpu_custom_call.1} parent=11 // pred_check
          %p161 = pneg %p85
        $region18: #{tpu_custom_call.1} parent=11 // pred_check_branch
          %163 = sbr.rel (%p161) target = $region20
        $region19: #{tpu_custom_call.1} parent=11 // pred_region
          %165 = vsyncadd [#allocation6], 0
          %s166 = sshll.u32 %s2, 4
          %s167 = int_to_ptr.hbm [resolvable:$true] %s166
          %s168 = sshll.u32 [#allocation7], 4
          %s169 = int_to_ptr.vmem [resolvable:$true] %s168
          %174 = dma.hbm_to_vmem [thread:$0]  %s167, 2048, %s169, [#allocation6], 128, 128, 8
        $region20: #{tpu_custom_call.1} parent=11 // pred_fallthru
          _
        // Predicated region
        $region21: #{tpu_custom_call.1} parent=11 // pred_check
          %p175 = pneg %p106
        $region22: #{tpu_custom_call.1} parent=11 // pred_check_branch
          %177 = sbr.rel (%p175) target = $region24
        $region23: #{tpu_custom_call.1} parent=11 // pred_region
          _
        $region24: #{tpu_custom_call.1} parent=11 // pred_fallthru
          _
      $region12: #{tpu_custom_call.1} parent=5 // pred_fallthru
        _
      %p178 = scmp.lt.s32.totalorder %s17, 2
      // Predicated region
      $region25: #{tpu_custom_call.1} parent=5 // pred_check
        %p179 = pneg %p178
      $region26: #{tpu_custom_call.1} parent=5 // pred_check_branch
        %181 = sbr.rel (%p179) target = $region28
      $region27: #{tpu_custom_call.1} parent=5 // pred_region
        // Predicated region
        $region29: #{tpu_custom_call.1} parent=27 // pred_check
          %p182 = pneg %p37
        $region30: #{tpu_custom_call.1} parent=27 // pred_check_branch
          %184 = sbr.rel (%p182) target = $region32
        $region31: #{tpu_custom_call.1} parent=27 // pred_region
          %s185 = sand.u32 %s27, 1
          %s186 = scalar_lea.sflag [#allocation3], %s185
          %s187 = sand.u32 %s27, 1
          %s188 = smul.addr %s187, 8
          %s189 = scalar_lea.vmem [#allocation2], %s188
          %191 = vsyncadd %s186, 0
          %s192 = smul.addr %s17, 8
          %s193 = scalar_lea.hbm %s0, %s192
          %s195 = sshll.u32 %s193, 4
          %s196 = int_to_ptr.hbm [resolvable:$true] %s195
          %s197 = sshll.u32 %s189, 4
          %s198 = int_to_ptr.vmem [resolvable:$true] %s197
          %200 = dma.hbm_to_vmem [thread:$0]  %s196, 128, %s198, %s186
        $region32: #{tpu_custom_call.1} parent=27 // pred_fallthru
          _
      $region28: #{tpu_custom_call.1} parent=5 // pred_fallthru
        _
      %p201 = scmp.le.s32.totalorder 1, %s17
      %p202 = scmp.lt.s32.totalorder %s17, 3
      %p203 = pnand %p201, %p202
      %p204 = pneg %p203
      // Predicated region
      $region33: #{tpu_custom_call.1} parent=5 // pred_check
        _
      $region34: #{tpu_custom_call.1} parent=5 // pred_check_branch
        %206 = sbr.rel (%p203) target = $region36
      $region35: #{tpu_custom_call.1} parent=5 // pred_region
        %s207 = ssub.s32 %s17, 1
        %s208 = sand.u32 %s30, 1
        %s209 = scalar_lea.sflag [#allocation3], %s208
        %s210 = sand.u32 %s30, 1
        %s211 = smul.addr %s210, 8
        %s212 = scalar_lea.vmem [#allocation2], %s211
        // Predicated region
        $region37: #{tpu_custom_call.1} parent=35 // pred_check
          %p213 = pneg %p43
        $region38: #{tpu_custom_call.1} parent=35 // pred_check_branch
          %215 = sbr.rel (%p213) target = $region40
        $region39: #{tpu_custom_call.1} parent=35 // pred_region
          %217 = dma.done %s209, 128
        $region40: #{tpu_custom_call.1} parent=35 // pred_fallthru
          _
        // Predicated region
        $region41: #{tpu_custom_call.1} parent=35 // pred_check
          %p218 = pneg %p64
        $region42: #{tpu_custom_call.1} parent=35 // pred_check_branch
          %220 = sbr.rel (%p218) target = $region44
        $region43: #{tpu_custom_call.1} parent=35 // pred_region
          %222 = dma.done [#allocation6], 2048
        $region44: #{tpu_custom_call.1} parent=35 // pred_fallthru
          _
        // Predicated region
        $region45: #{tpu_custom_call.1} parent=35 // pred_check
          %p223 = pneg %p85
        $region46: #{tpu_custom_call.1} parent=35 // pred_check_branch
          %225 = sbr.rel (%p223) target = $region48
        $region47: #{tpu_custom_call.1} parent=35 // pred_region
          %227 = dma.done [#allocation6], 2048
        $region48: #{tpu_custom_call.1} parent=35 // pred_fallthru
          _
        %s228 = sand.u32 %s30, 1
        %s229 = scalar_lea.sflag [#allocation3], %s228
        %s230 = sand.u32 %s30, 1
        %s231 = smul.addr %s230, 8
        %s232 = scalar_lea.vmem [#allocation2], %s231
        %p233 = pneg %p43
        %p234 = pneg %p40
        %p235 = pneg %p64
        %p236 = pneg %p61
        %p237 = pneg %p85
        %p238 = pneg %p82
        %p239 = pneg %p106
        %p240 = pneg %p103
        %p241 = pneg %p132
        %p242 = pneg %p129
        %s243 = sand.u32 %s119, 1
        %s244 = scalar_lea.sflag [#allocation4], %s243
        %s245 = sand.u32 %s119, 1
        %s246 = smul.addr %s245, 8
        %s247 = scalar_lea.vmem [#allocation8], %s246
        %v248 = vld [vmem:[%s212] sm:$0xff]
        %v249 = vld [vmem:[#allocation5] sm:$0xff]
        %v250 = vld [vmem:[#allocation5 + $0x8] sm:$0xff]
        %v251 = vld [vmem:[#allocation5 + $0x10] sm:$0xff]
        %v252 = vld [vmem:[#allocation5 + $0x18] sm:$0xff]
        %v253 = vld [vmem:[#allocation5 + $0x20] sm:$0xff]
        %v254 = vld [vmem:[#allocation5 + $0x28] sm:$0xff]
        %v255 = vld [vmem:[#allocation5 + $0x30] sm:$0xff]
        %v256 = vld [vmem:[#allocation5 + $0x38] sm:$0xff]
        %v257 = vld [vmem:[#allocation5 + $0x40] sm:$0xff]
        %v258 = vld [vmem:[#allocation5 + $0x48] sm:$0xff]
        %v259 = vld [vmem:[#allocation5 + $0x50] sm:$0xff]
        %v260 = vld [vmem:[#allocation5 + $0x58] sm:$0xff]
        %v261 = vld [vmem:[#allocation5 + $0x60] sm:$0xff]
        %v262 = vld [vmem:[#allocation5 + $0x68] sm:$0xff]
        %v263 = vld [vmem:[#allocation5 + $0x70] sm:$0xff]
        %v264 = vld [vmem:[#allocation5 + $0x78] sm:$0xff]
        %265 = vmatpush.msra.mxu0 %v264
        %266 = vmatpush.msra.mxu0 %v263
        %267 = vmatpush.msra.mxu0 %v262
        %268 = vmatpush.msra.mxu0 %v261
        %269 = vmatpush.msra.mxu0 %v260
        %270 = vmatpush.msra.mxu0 %v259
        %271 = vmatpush.msra.mxu0 %v258
        %272 = vmatpush.msra.mxu0 %v257
        %273 = vmatpush.msra.mxu0 %v256
        %274 = vmatpush.msra.mxu0 %v255
        %275 = vmatpush.msra.mxu0 %v254
        %276 = vmatpush.msra.mxu0 %v253
        %277 = vmatpush.msra.mxu0 %v252
        %278 = vmatpush.msra.mxu0 %v251
        %279 = vmatpush.msra.mxu0 %v250
        %280 = vmatpush.msra.mxu0 %v249
        %281 = vmatmul.f32.gmra.mxu0 %v248
        %v282 = vpop.f32.mrf.mxu0
        %v283 = vadd.f32 0.0, %v282
        %284 = vdwg.mxu0
        %v285 = vld [vmem:[%s3] sm:$0x1]
        %v286 = vsub.f32 0.0, %v285
        %v288 = vperm.slane %v286, 0
        %v290 = vmax.f32 %v288, %v283
        %v292 = vperm.slane %v285, 0
        %v294 = vmin.f32 %v292, %v290
        %v295 = vsub.f32 %v283, %v294
        %v296 = vld [vmem:[#allocation7] sm:$0xff]
        %v297 = vld [vmem:[#allocation7 + $0x8] sm:$0xff]
        %v298 = vld [vmem:[#allocation7 + $0x10] sm:$0xff]
        %v299 = vld [vmem:[#allocation7 + $0x18] sm:$0xff]
        %v300 = vld [vmem:[#allocation7 + $0x20] sm:$0xff]
        %v301 = vld [vmem:[#allocation7 + $0x28] sm:$0xff]
        %v302 = vld [vmem:[#allocation7 + $0x30] sm:$0xff]
        %v303 = vld [vmem:[#allocation7 + $0x38] sm:$0xff]
        %v304 = vld [vmem:[#allocation7 + $0x40] sm:$0xff]
        %v305 = vld [vmem:[#allocation7 + $0x48] sm:$0xff]
        %v306 = vld [vmem:[#allocation7 + $0x50] sm:$0xff]
        %v307 = vld [vmem:[#allocation7 + $0x58] sm:$0xff]
        %v308 = vld [vmem:[#allocation7 + $0x60] sm:$0xff]
        %v309 = vld [vmem:[#allocation7 + $0x68] sm:$0xff]
        %v310 = vld [vmem:[#allocation7 + $0x70] sm:$0xff]
        %v311 = vld [vmem:[#allocation7 + $0x78] sm:$0xff]
        %312 = vmatpush.msra.mxu0 %v311
        %313 = vmatpush.msra.mxu0 %v310
        %314 = vmatpush.msra.mxu0 %v309
        %315 = vmatpush.msra.mxu0 %v308
        %316 = vmatpush.msra.mxu0 %v307
        %317 = vmatpush.msra.mxu0 %v306
        %318 = vmatpush.msra.mxu0 %v305
        %319 = vmatpush.msra.mxu0 %v304
        %320 = vmatpush.msra.mxu0 %v303
        %321 = vmatpush.msra.mxu0 %v302
        %322 = vmatpush.msra.mxu0 %v301
        %323 = vmatpush.msra.mxu0 %v300
        %324 = vmatpush.msra.mxu0 %v299
        %325 = vmatpush.msra.mxu0 %v298
        %326 = vmatpush.msra.mxu0 %v297
        %327 = vmatpush.msra.mxu0 %v296
        %328 = vmatmul.f32.gmra.mxu0 %v295
        %v329 = vpop.f32.mrf.mxu0
        %v330 = vadd.f32 %v248, %v329
        %331 = vdwg.mxu0
        %332 = vst [vmem:[%s247] sm:$0xff] %v330
        %s333 = sand.u32 %s119, 1
        %s334 = scalar_lea.sflag [#allocation4], %s333
        %s335 = sand.u32 %s119, 1
        %s336 = smul.addr %s335, 8
        %s337 = scalar_lea.vmem [#allocation8], %s336
        // Predicated region
        $region49: #{tpu_custom_call.1} parent=35 // pred_check
          %p338 = pneg %p129
        $region50: #{tpu_custom_call.1} parent=35 // pred_check_branch
          %340 = sbr.rel (%p338) target = $region52
        $region51: #{tpu_custom_call.1} parent=35 // pred_region
          %342 = vsyncadd %s334, 0
          %s343 = smul.addr %s22, 8
          %s344 = scalar_lea.hbm %s4, %s343
          %s346 = sshll.u32 %s337, 4
          %s347 = int_to_ptr.vmem [resolvable:$true] %s346
          %s348 = sshll.u32 %s344, 4
          %s349 = int_to_ptr.hbm [resolvable:$true] %s348
          %351 = dma.vmem_to_hbm [thread:$0]  %s347, 128, %s349, %s334
        $region52: #{tpu_custom_call.1} parent=35 // pred_fallthru
          _
      $region36: #{tpu_custom_call.1} parent=5 // pred_fallthru
        _
      %p352 = scmp.le.s32.totalorder 2, %s17
      // Predicated region
      $region53: #{tpu_custom_call.1} parent=5 // pred_check
        %p353 = pneg %p352
      $region54: #{tpu_custom_call.1} parent=5 // pred_check_branch
        %355 = sbr.rel (%p353) target = $region56
      $region55: #{tpu_custom_call.1} parent=5 // pred_region
        %s356 = ssub.s32 %s17, 2
        // Predicated region
        $region57: #{tpu_custom_call.1} parent=55 // pred_check
          %p357 = pneg %p135
        $region58: #{tpu_custom_call.1} parent=55 // pred_check_branch
          %359 = sbr.rel (%p357) target = $region60
        $region59: #{tpu_custom_call.1} parent=55 // pred_region
          %s360 = sand.u32 %s120, 1
          %s361 = scalar_lea.sflag [#allocation4], %s360
          %s362 = sand.u32 %s120, 1
          %s363 = smul.addr %s362, 8
          %s364 = scalar_lea.vmem [#allocation8], %s363
          %366 = dma.done %s361, 128
        $region60: #{tpu_custom_call.1} parent=55 // pred_fallthru
          _
      $region56: #{tpu_custom_call.1} parent=5 // pred_fallthru
        _
    $region6: #{tpu_custom_call.1} parent=1 // loop_footer
      %s21 = sadd.s32 1, %s17
    $region7: #{tpu_custom_call.1} parent=1 // loop_footer_branch
      %16 = sbr.rel target = $region3
    $region8: #{tpu_custom_call.1} parent=1 // loop_exit
      _
    %367 = vsyncpa [#allocation3], 1
    %s368 = scalar_lea.sflag [#allocation3], 1
    %369 = vsyncpa %s368, 1
    %370 = vsyncpa [#allocation6], 1
    %371 = vsyncpa [#allocation4], 1
    %s372 = scalar_lea.sflag [#allocation4], 1
    %373 = vsyncpa %s372, 1

</llo_original>
